<compile_context>
chip_gen: v7x
topology: tpu7x:2x2x1
jax: 0.10.0
libtpu: 0.0.40
codegen_flags: <defaults>
</compile_context>

<pallas_src>
from functools import partial
from typing import NamedTuple

import jax
import jax.numpy as jnp
from jax.experimental import pallas as pl
from jax.experimental.pallas import tpu as pltpu


# -------------------------- parameter packing (init-time) --------------------
def _round8(x: int) -> int:
    return ((x + 7) // 8) * 8


class NetMeta(NamedTuple):
    d1: int
    d2: int
    h1: int
    h2: int
    rep: int


_PARAM_ORDER = ("m1_w1", "m1_b1", "m1_w2", "m1_b2",
                "m2_w1", "m2_b1", "m2_w2", "m2_b2")


def _param_offsets(d1, h1, d2, h2):
    """Static, sublane-aligned row offset of each block in the packed buffer."""
    rows = {"m1_w1": d1, "m1_b1": 1, "m1_w2": h1, "m1_b2": 1,
            "m2_w1": d2, "m2_b1": 1, "m2_w2": h2, "m2_b2": 1}
    offs, o = {}, 0
    for name in _PARAM_ORDER:
        offs[name] = o
        o += _round8(rows[name])
    return offs, o


def pack_net_params(params):
    """One-time packing of all 8 weights/biases into a single padded f32 buffer.

    Call ONCE at init; the per-call forward only DMAs the returned buffer.
    Weights are stored [in, out] (transposed vs nn.Linear), so y = x @ W + b.
    """
    d1, h1 = params["m1_w1"].shape
    d2, h2 = params["m2_w1"].shape
    rep = params["m1_w2"].shape[1]
    width = max(h1, h2, rep)
    offs, total_rows = _param_offsets(d1, h1, d2, h2)

    buf = jnp.zeros((total_rows, width), jnp.float32)
    for name in _PARAM_ORDER:
        a = params[name].astype(jnp.float32)
        buf = buf.at[offs[name]:offs[name] + a.shape[0], 0:a.shape[1]].set(a)

    meta = NetMeta(d1=d1, d2=d2, h1=h1, h2=h2, rep=rep)
    return jax.device_put(buf), meta


# ------------------------------ fused kernel ---------------------------------
def _make_kernel(emb_norm, n, meta):
    d1, d2, h1, h2, rep = meta.d1, meta.d2, meta.h1, meta.h2, meta.rep
    offs, _ = _param_offsets(d1, h1, d2, h2)
    two_n = 2 * n

    def kernel(x1_ref, x2_ref, p_ref, q_ref, e_ref):
        def w(name, rows, cols):
            # Direct Ref slice (8-row aligned, lane offset 0): loaded at point
            # of use, never held live across the whole kernel.
            o = offs[name]
            return p_ref[o:o + rows, 0:cols]

        # ---- per-branch encoder layers (tiny MXU matmuls, f32 accumulation) --
        x1 = x1_ref[...].astype(jnp.float32)
        x2 = x2_ref[...].astype(jnp.float32)
        h1v = jnp.tanh(jnp.dot(x1, w("m1_w1", d1, h1),
                               preferred_element_type=jnp.float32)
                       + w("m1_b1", 1, h1))
        h2v = jnp.tanh(jnp.dot(x2, w("m2_w1", d2, h2),
                               preferred_element_type=jnp.float32)
                       + w("m2_b1", 1, h2))
        e1 = jnp.tanh(jnp.dot(h1v, w("m1_w2", h1, rep),
                              preferred_element_type=jnp.float32)
                      + w("m1_b2", 1, rep))
        e2 = jnp.tanh(jnp.dot(h2v, w("m2_w2", h2, rep),
                              preferred_element_type=jnp.float32)
                      + w("m2_b2", 1, rep))

        # ---- fused tail: both branches row-stacked, everything runs once ----
        e = jnp.concatenate([e1, e2], axis=0)                    # (2n, rep)

        # Row L2 norm: x / max(||x||, 1e-8) == x * rsqrt(max(||x||^2, 1e-16)).
        ssq = jnp.sum(e * e, axis=1, keepdims=True)
        e_hat = e * jax.lax.rsqrt(jnp.maximum(ssq, 1e-16))
        e_out = e_hat if emb_norm else e
        # (For emb_norm=False the cosine is formed from internally-normalized
        #  rows; identical to the reference's clamp(|a||b|,1e-8) division for
        #  any non-degenerate (norm > 1e-8) embedding.)

        # Per-branch cosine Gram blocks, stacked to (2n, n).
        g1 = jnp.einsum("nd,md->nm", e_hat[0:n], e_hat[0:n],
                        preferred_element_type=jnp.float32)
        g2 = jnp.einsum("nd,md->nm", e_hat[n:two_n], e_hat[n:two_n],
                        preferred_element_type=jnp.float32)
        dis = 1.0 - jnp.concatenate([g1, g2], axis=0)            # (2n, n)

        # softmax(-dis^2) with zeroed diagonal; the softmax normalization and
        # the post-diag renormalization collapse into one row-sum + divide.
        # logits in [-4, 0] -> no overflow, so no max-subtraction needed.
        p = jnp.exp(-(dis * dis))
        ri = jax.lax.broadcasted_iota(jnp.int32, (two_n, n), 0)
        ci = jax.lax.broadcasted_iota(jnp.int32, (two_n, n), 1)
        p = jnp.where((ri % n) == ci, 0.0, p)
        s = jnp.sum(p, axis=1, keepdims=True)
        inv = pl.reciprocal(s, approx=True)        # EUP vrcp
        inv = inv * (2.0 - s * inv)                # one Newton step -> ~f32 exact
        q = jnp.log(jnp.maximum(p * inv, 1e-8))    # (2n, n)

        # Single full-ref store per output (no partial/masked row stores).
        q_ref[...] = q
        e_ref[...] = e_out

    return kernel


# -------------------------------- wrapper ------------------------------------
@partial(jax.jit, static_argnames=("meta", "emb_norm"))
def net_forward(x1, x2, packed_params, meta, emb_norm=True):
    """Full Net.forward: returns (Q1, Q2, m1EMB, m2EMB).

    x1: [N, m1Size], x2: [N, m2Size]; `packed_params`, `meta` from
    pack_net_params (call once at init, NOT per forward).
    """
    n = x1.shape[0]
    rep = meta.rep
    vmem = pl.BlockSpec(memory_space=pltpu.MemorySpace.VMEM)
    q, e = pl.pallas_call(
        _make_kernel(emb_norm, n, meta),
        out_shape=(jax.ShapeDtypeStruct((2 * n, n), jnp.float32),
                   jax.ShapeDtypeStruct((2 * n, rep), jnp.float32)),
        in_specs=[vmem, vmem, vmem],
        out_specs=(vmem, vmem),
    )(x1, x2, packed_params)
    return q[:n], q[n:], e[:n], e[n:]


# -------------------- pure-JAX reference (PyTorch semantics) -----------------
def _ref_branch(x, w1, b1, w2, b2, emb_norm):
    h = jnp.tanh(x @ w1 + b1)
    e = jnp.tanh(h @ w2 + b2)
    if emb_norm:
        e = e / jnp.maximum(jnp.linalg.norm(e, axis=1, keepdims=True), 1e-8)
    w12 = e @ e.T
    nrm = jnp.linalg.norm(e, axis=1, keepdims=True)
    dis = 1.0 - w12 / jnp.maximum(nrm @ nrm.T, 1e-8)
    p = jax.nn.softmax(-dis * dis, axis=1)
    p = p - jnp.diag(jnp.diag(p))
    p = p / jnp.sum(p, axis=1, keepdims=True)
    return jnp.log(jnp.maximum(p, 1e-8)), e


if __name__ == "__main__":
    # conf: m1Size=16, m2Size=24, hdn1=32, hdn2=32, rep=16, emb_norm=True
    N, M1, M2, H1, H2, REP = 8, 16, 24, 32, 32, 16

    key = jax.random.PRNGKey(0)
    keys = jax.random.split(key, 10)
    x1 = jax.random.normal(keys[0], (N, M1), jnp.float32)
    x2 = jax.random.normal(keys[1], (N, M2), jnp.float32)

    params = {
        "m1_w1": 0.3 * jax.random.normal(keys[2], (M1, H1), jnp.float32),
        "m1_b1": 0.1 * jax.random.normal(keys[3], (1, H1), jnp.float32),
        "m1_w2": 0.3 * jax.random.normal(keys[4], (H1, REP), jnp.float32),
        "m1_b2": 0.1 * jax.random.normal(keys[5], (1, REP), jnp.float32),
        "m2_w1": 0.3 * jax.random.normal(keys[6], (M2, H2), jnp.float32),
        "m2_b1": 0.1 * jax.random.normal(keys[7], (1, H2), jnp.float32),
        "m2_w2": 0.3 * jax.random.normal(keys[8], (H2, REP), jnp.float32),
        "m2_b2": 0.1 * jax.random.normal(keys[9], (1, REP), jnp.float32),
    }

    # One-time, init-path packing (hoisted out of the per-call forward).
    packed, meta = pack_net_params(params)
    jax.block_until_ready(packed)

    q1, q2, e1, e2 = net_forward(x1, x2, packed, meta=meta, emb_norm=True)
    jax.block_until_ready((q1, q2, e1, e2))

    # Sanity check against pure-JAX reference (exact PyTorch semantics).
    rq1, re1 = _ref_branch(x1, params["m1_w1"], params["m1_b1"],
                           params["m1_w2"], params["m1_b2"], True)
    rq2, re2 = _ref_branch(x2, params["m2_w1"], params["m2_b1"],
                           params["m2_w2"], params["m2_b2"], True)
    assert jnp.allclose(q1, rq1, atol=1e-4), "Q1 mismatch"
    assert jnp.allclose(q2, rq2, atol=1e-4), "Q2 mismatch"
    assert jnp.allclose(e1, re1, atol=1e-5), "m1EMB mismatch"
    assert jnp.allclose(e2, re2, atol=1e-5), "m2EMB mismatch"

    print("KERNEL_OK")
</pallas_src>

<mosaic_0001>
module attributes {stable_mosaic.version = 11 : i64} {
  func.func @kernel(%arg0: memref<8x16xf32, #tpu.memory_space<vmem>>, %arg1: memref<8x24xf32, #tpu.memory_space<vmem>>, %arg2: memref<136x32xf32, #tpu.memory_space<vmem>>, %arg3: memref<16x8xf32, #tpu.memory_space<vmem>>, %arg4: memref<16x16xf32, #tpu.memory_space<vmem>>) attributes {dimension_semantics = [], scalar_prefetch = 0 : i64, scratch_operands = 0 : i64, tpu.core_type = #tpu.core_type<tc>} {
    %c0 = arith.constant 0 : index
    %c0_0 = arith.constant 0 : index
    %0 = vector.load %arg0[%c0, %c0_0] : memref<8x16xf32, #tpu.memory_space<vmem>>, vector<8x16xf32>
    %c0_1 = arith.constant 0 : index
    %c0_2 = arith.constant 0 : index
    %1 = vector.load %arg1[%c0_1, %c0_2] : memref<8x24xf32, #tpu.memory_space<vmem>>, vector<8x24xf32>
    %c0_3 = arith.constant 0 : index
    %c0_4 = arith.constant 0 : index
    %2 = vector.load %arg2[%c0_3, %c0_4] : memref<136x32xf32, #tpu.memory_space<vmem>>, vector<16x32xf32>
    %cst = arith.constant dense<0.000000e+00> : vector<8x32xf32>
    %3 = tpu.matmul %0, %2, %cst {dimension_numbers = #tpu.dot_dimension_numbers<[1], [0], [0], [1], [0, 0, 1, 1], [], []>} : vector<8x16xf32>, vector<16x32xf32>, vector<8x32xf32> -> vector<8x32xf32>
    %c16 = arith.constant 16 : index
    %c0_5 = arith.constant 0 : index
    %4 = vector.load %arg2[%c16, %c0_5] : memref<136x32xf32, #tpu.memory_space<vmem>>, vector<1x32xf32>
    %5 = vector.broadcast %4 : vector<1x32xf32> to vector<8x32xf32>
    %6 = arith.addf %3, %5 : vector<8x32xf32>
    %7 = math.tanh %6 : vector<8x32xf32>
    %c64 = arith.constant 64 : index
    %c0_6 = arith.constant 0 : index
    %8 = vector.load %arg2[%c64, %c0_6] : memref<136x32xf32, #tpu.memory_space<vmem>>, vector<24x32xf32>
    %cst_7 = arith.constant dense<0.000000e+00> : vector<8x32xf32>
    %9 = tpu.matmul %1, %8, %cst_7 {dimension_numbers = #tpu.dot_dimension_numbers<[1], [0], [0], [1], [0, 0, 1, 1], [], []>} : vector<8x24xf32>, vector<24x32xf32>, vector<8x32xf32> -> vector<8x32xf32>
    %c88 = arith.constant 88 : index
    %c0_8 = arith.constant 0 : index
    %10 = vector.load %arg2[%c88, %c0_8] : memref<136x32xf32, #tpu.memory_space<vmem>>, vector<1x32xf32>
    %11 = vector.broadcast %10 : vector<1x32xf32> to vector<8x32xf32>
    %12 = arith.addf %9, %11 : vector<8x32xf32>
    %13 = math.tanh %12 : vector<8x32xf32>
    %c24 = arith.constant 24 : index
    %c0_9 = arith.constant 0 : index
    %14 = vector.load %arg2[%c24, %c0_9] : memref<136x32xf32, #tpu.memory_space<vmem>>, vector<32x16xf32>
    %cst_10 = arith.constant dense<0.000000e+00> : vector<8x16xf32>
    %15 = tpu.matmul %7, %14, %cst_10 {dimension_numbers = #tpu.dot_dimension_numbers<[1], [0], [0], [1], [0, 0, 1, 1], [], []>} : vector<8x32xf32>, vector<32x16xf32>, vector<8x16xf32> -> vector<8x16xf32>
    %c56 = arith.constant 56 : index
    %c0_11 = arith.constant 0 : index
    %16 = vector.load %arg2[%c56, %c0_11] : memref<136x32xf32, #tpu.memory_space<vmem>>, vector<1x16xf32>
    %17 = vector.broadcast %16 : vector<1x16xf32> to vector<8x16xf32>
    %18 = arith.addf %15, %17 : vector<8x16xf32>
    %19 = math.tanh %18 : vector<8x16xf32>
    %c96 = arith.constant 96 : index
    %c0_12 = arith.constant 0 : index
    %20 = vector.load %arg2[%c96, %c0_12] : memref<136x32xf32, #tpu.memory_space<vmem>>, vector<32x16xf32>
    %cst_13 = arith.constant dense<0.000000e+00> : vector<8x16xf32>
    %21 = tpu.matmul %13, %20, %cst_13 {dimension_numbers = #tpu.dot_dimension_numbers<[1], [0], [0], [1], [0, 0, 1, 1], [], []>} : vector<8x32xf32>, vector<32x16xf32>, vector<8x16xf32> -> vector<8x16xf32>
    %c128 = arith.constant 128 : index
    %c0_14 = arith.constant 0 : index
    %22 = vector.load %arg2[%c128, %c0_14] : memref<136x32xf32, #tpu.memory_space<vmem>>, vector<1x16xf32>
    %23 = vector.broadcast %22 : vector<1x16xf32> to vector<8x16xf32>
    %24 = arith.addf %21, %23 : vector<8x16xf32>
    %25 = math.tanh %24 : vector<8x16xf32>
    %26 = tpu.concatenate %19, %25 in 0 : vector<8x16xf32>, vector<8x16xf32> -> vector<16x16xf32>
    %27 = arith.mulf %26, %26 : vector<16x16xf32>
    %cst_15 = arith.constant dense<0.000000e+00> : vector<16xf32>
    %28 = vector.multi_reduction <add>, %27, %cst_15 [1] : vector<16x16xf32> to vector<16xf32>
    %29 = vector.shape_cast %28 : vector<16xf32> to vector<16x1xf32>
    %cst_16 = arith.constant 1.000000e-16 : f32
    %30 = vector.broadcast %cst_16 : f32 to vector<16x1xf32>
    %31 = arith.maximumf %29, %30 : vector<16x1xf32>
    %32 = math.rsqrt %31 : vector<16x1xf32>
    %33 = vector.broadcast %32 : vector<16x1xf32> to vector<16x16xf32>
    %34 = arith.mulf %26, %33 : vector<16x16xf32>
    %35 = vector.extract_strided_slice %34 {offsets = [0, 0], sizes = [8, 16], strides = [1, 1]} : vector<16x16xf32> to vector<8x16xf32>
    %36 = vector.extract_strided_slice %34 {offsets = [0, 0], sizes = [8, 16], strides = [1, 1]} : vector<16x16xf32> to vector<8x16xf32>
    "tpu.trace_start"() <{level = 10 : i32, message = "nd,md->nm"}> : () -> ()
    %cst_17 = arith.constant dense<0.000000e+00> : vector<8x8xf32>
    %37 = tpu.matmul %35, %36, %cst_17 {dimension_numbers = #tpu.dot_dimension_numbers<[1], [1], [0], [0], [0, 0, 1, 0], [], []>} : vector<8x16xf32>, vector<8x16xf32>, vector<8x8xf32> -> vector<8x8xf32>
    "tpu.trace_stop"() : () -> ()
    %38 = vector.extract_strided_slice %34 {offsets = [8, 0], sizes = [8, 16], strides = [1, 1]} : vector<16x16xf32> to vector<8x16xf32>
    %39 = vector.extract_strided_slice %34 {offsets = [8, 0], sizes = [8, 16], strides = [1, 1]} : vector<16x16xf32> to vector<8x16xf32>
    "tpu.trace_start"() <{level = 10 : i32, message = "nd,md->nm"}> : () -> ()
    %cst_18 = arith.constant dense<0.000000e+00> : vector<8x8xf32>
    %40 = tpu.matmul %38, %39, %cst_18 {dimension_numbers = #tpu.dot_dimension_numbers<[1], [1], [0], [0], [0, 0, 1, 0], [], []>} : vector<8x16xf32>, vector<8x16xf32>, vector<8x8xf32> -> vector<8x8xf32>
    "tpu.trace_stop"() : () -> ()
    %41 = tpu.concatenate %37, %40 in 0 : vector<8x8xf32>, vector<8x8xf32> -> vector<16x8xf32>
    %cst_19 = arith.constant 1.000000e+00 : f32
    %42 = vector.broadcast %cst_19 : f32 to vector<16x8xf32>
    %43 = arith.subf %42, %41 : vector<16x8xf32>
    %44 = arith.mulf %43, %43 : vector<16x8xf32>
    %cst_20 = arith.constant 0.000000e+00 : f32
    %45 = vector.broadcast %cst_20 : f32 to vector<16x8xf32>
    %46 = arith.subf %45, %44 : vector<16x8xf32>
    %47 = math.exp %46 : vector<16x8xf32>
    %48 = tpu.iota {dimensions = array<i32: 0>} : vector<16x8xi32>
    %49 = tpu.iota {dimensions = array<i32: 1>} : vector<16x8xi32>
    %c8_i32 = arith.constant 8 : i32
    %c0_i32 = arith.constant 0 : i32
    %50 = arith.cmpi eq, %c8_i32, %c0_i32 : i32
    %c1_i32 = arith.constant 1 : i32
    %51 = arith.select %50, %c1_i32, %c8_i32 : i32
    %52 = vector.broadcast %51 : i32 to vector<16x8xi32>
    %53 = arith.remsi %48, %52 : vector<16x8xi32>
    %c0_i32_21 = arith.constant 0 : i32
    %54 = vector.broadcast %c0_i32_21 : i32 to vector<16x8xi32>
    %55 = arith.cmpi ne, %53, %54 : vector<16x8xi32>
    %c0_i32_22 = arith.constant 0 : i32
    %56 = vector.broadcast %c0_i32_22 : i32 to vector<16x8xi32>
    %57 = arith.cmpi slt, %53, %56 : vector<16x8xi32>
    %c0_i32_23 = arith.constant 0 : i32
    %58 = arith.cmpi slt, %51, %c0_i32_23 : i32
    %59 = vector.broadcast %58 : i1 to vector<16x8xi1>
    %60 = vector.broadcast %59 : vector<16x8xi1> to vector<16x8xi1>
    %61 = arith.xori %57, %60 : vector<16x8xi1>
    %62 = arith.andi %61, %55 : vector<16x8xi1>
    %63 = vector.broadcast %51 : i32 to vector<16x8xi32>
    %64 = arith.addi %53, %63 : vector<16x8xi32>
    %65 = arith.select %62, %64, %53 : vector<16x8xi1>, vector<16x8xi32>
    %66 = arith.cmpi eq, %65, %49 : vector<16x8xi32>
    %cst_24 = arith.constant 0.000000e+00 : f32
    %67 = vector.broadcast %cst_24 : f32 to vector<16x8xf32>
    %68 = arith.select %66, %67, %47 : vector<16x8xi1>, vector<16x8xf32>
    %cst_25 = arith.constant dense<0.000000e+00> : vector<16xf32>
    %69 = vector.multi_reduction <add>, %68, %cst_25 [1] : vector<16x8xf32> to vector<16xf32>
    %70 = vector.shape_cast %69 : vector<16xf32> to vector<16x1xf32>
    %71 = tpu.reciprocal %70 {approx = true} : vector<16x1xf32> -> vector<16x1xf32>
    %72 = arith.mulf %70, %71 : vector<16x1xf32>
    %cst_26 = arith.constant 2.000000e+00 : f32
    %73 = vector.broadcast %cst_26 : f32 to vector<16x1xf32>
    %74 = arith.subf %73, %72 : vector<16x1xf32>
    %75 = arith.mulf %71, %74 : vector<16x1xf32>
    %76 = vector.broadcast %75 : vector<16x1xf32> to vector<16x8xf32>
    %77 = arith.mulf %68, %76 : vector<16x8xf32>
    %cst_27 = arith.constant 9.99999993E-9 : f32
    %78 = vector.broadcast %cst_27 : f32 to vector<16x8xf32>
    %79 = arith.maximumf %77, %78 : vector<16x8xf32>
    %80 = math.log %79 : vector<16x8xf32>
    %c0_28 = arith.constant 0 : index
    %c0_29 = arith.constant 0 : index
    %81 = vector.load %arg3[%c0_28, %c0_29] : memref<16x8xf32, #tpu.memory_space<vmem>>, vector<16x8xf32>
    tpu.vector_store %arg3[%c0_28, %c0_29], %80 {strides = array<i32>} : memref<16x8xf32, #tpu.memory_space<vmem>>, vector<16x8xf32>,
    %c0_30 = arith.constant 0 : index
    %c0_31 = arith.constant 0 : index
    %82 = vector.load %arg4[%c0_30, %c0_31] : memref<16x16xf32, #tpu.memory_space<vmem>>, vector<16x16xf32>
    tpu.vector_store %arg4[%c0_30, %c0_31], %34 {strides = array<i32>} : memref<16x16xf32, #tpu.memory_space<vmem>>, vector<16x16xf32>,
    return
  }
}

</mosaic_0001>

<llo_original>
// kernel: net_forward.1
$region0: #{net_forward.1}
  #allocation0 [shape = 'u32[]', space=smem, size = 0x4, offset = 0x4, fixed_abs, tag = 'smem constant byte address 0x4 - core index']
  #allocation1 [shape = 'u32[144,128]{1,0:T(1,128)}', space=vmem, size = 0x12000, scoped, tag = 'internal scratch']
  %s0 = inlined_call_operand.vmem [shape: f32[8,16], index: 0, kind: input, shape index: {}]
  %s1 = inlined_call_operand.vmem [shape: f32[8,24], index: 1, kind: input, shape index: {}]
  %s2 = inlined_call_operand.vmem [shape: f32[136,32], index: 2, kind: input, shape index: {}]
  %s3 = inlined_call_operand.vmem [shape: f32[16,8], index: 3, kind: output, shape index: {0}]
  %s4 = inlined_call_operand.vmem [shape: f32[16,16], index: 4, kind: output, shape index: {1}]
  %5 = xla_tuple %s3, %s4
  %s6 = sld [smem:[#allocation0]]
  $region30: #{net_forward.1} parent=0
    _
  %s8 = ssub.s32 1, %s6
  %s9 = scalar_select 0, %s8, %s6
  // Predicated region
  $region2: #{net_forward.1} parent=0 // pred_check
    _
  $region3: #{net_forward.1} parent=0 // pred_check_branch
    %11 = sbr.rel (0) target = $region5
  $region4: #{net_forward.1} parent=0 // pred_region
    _
  $region5: #{net_forward.1} parent=0 // pred_fallthru
    _
  // Predicated region
  $region6: #{net_forward.1} parent=0 // pred_check
    _
  $region7: #{net_forward.1} parent=0 // pred_check_branch
    %13 = sbr.rel (0) target = $region9
  $region8: #{net_forward.1} parent=0 // pred_region
    _
  $region9: #{net_forward.1} parent=0 // pred_fallthru
    _
  // Predicated region
  $region10: #{net_forward.1} parent=0 // pred_check
    _
  $region11: #{net_forward.1} parent=0 // pred_check_branch
    %15 = sbr.rel (0) target = $region13
  $region12: #{net_forward.1} parent=0 // pred_region
    _
  $region13: #{net_forward.1} parent=0 // pred_fallthru
    _
  %v16 = vld [vmem:[%s0] sm:$0xff]
  %v17 = vld [vmem:[%s1] sm:$0xff]
  %v18 = vld [vmem:[%s2] sm:$0xff]
  %v19 = vld [vmem:[%s2 + $0x8] sm:$0xff]
  %v20 = vld [vmem:[%s2 + $0x10] sm:$0x1]
  %v21 = vlaneseq
  %v22 = vshrl.u32 %v21, 7
  %v23 = vsub.s32 0, %v22
  %v24 = vrot.slane %v20, %v23
  %vm25 = vcmask 130048
  %v27 = vsel %vm25, %v16, 0
  %29 = vmatprep.subr.mxu0 0.0
  %30 = vmatpush1.msra.mxu0 %v18
  %31 = vmatprep.subr.mxu0 0.0
  %32 = vmatpush1.msra.mxu0 %v19
  %33 = vmatprep.subr.mxu0 0.0
  %34 = vmatpush1.msra.mxu0 0.0
  %35 = vmatprep.subr.mxu0 0.0
  %36 = vmatpush1.msra.mxu0 0.0
  %37 = vmatprep.subr.mxu0 0.0
  %38 = vmatpush1.msra.mxu0 0.0
  %39 = vmatprep.subr.mxu0 0.0
  %40 = vmatpush1.msra.mxu0 0.0
  %41 = vmatprep.subr.mxu0 0.0
  %42 = vmatpush1.msra.mxu0 0.0
  %43 = vmatprep.subr.mxu0 0.0
  %44 = vmatpush1.msra.mxu0 0.0
  %45 = vmatprep.subr.mxu0 0.0
  %46 = vmatpush1.msra.mxu0 0.0
  %47 = vmatprep.subr.mxu0 0.0
  %48 = vmatpush1.msra.mxu0 0.0
  %49 = vmatprep.subr.mxu0 0.0
  %50 = vmatpush1.msra.mxu0 0.0
  %51 = vmatprep.subr.mxu0 0.0
  %52 = vmatpush1.msra.mxu0 0.0
  %53 = vmatprep.subr.mxu0 0.0
  %54 = vmatpush1.msra.mxu0 0.0
  %55 = vmatprep.subr.mxu0 0.0
  %56 = vmatpush1.msra.mxu0 0.0
  %57 = vmatprep.subr.mxu0 0.0
  %58 = vmatpush1.msra.mxu0 0.0
  %59 = vmatprep.subr.mxu0 0.0
  %60 = vmatpush1.msra.mxu0 0.0
  %61 = vmatprep.subr.mxu0 0.0
  %62 = vmatpush1.msra.mxu0 0.0
  %63 = vmatprep.subr.mxu0 0.0
  %64 = vmatpush1.msra.mxu0 0.0
  %65 = vmatprep.subr.mxu0 0.0
  %66 = vmatpush1.msra.mxu0 0.0
  %67 = vmatprep.subr.mxu0 0.0
  %68 = vmatpush1.msra.mxu0 0.0
  %69 = vmatprep.subr.mxu0 0.0
  %70 = vmatpush1.msra.mxu0 0.0
  %71 = vmatprep.subr.mxu0 0.0
  %72 = vmatpush1.msra.mxu0 0.0
  %73 = vmatprep.subr.mxu0 0.0
  %74 = vmatpush1.msra.mxu0 0.0
  %75 = vmatprep.subr.mxu0 0.0
  %76 = vmatpush1.msra.mxu0 0.0
  %77 = vmatprep.subr.mxu0 0.0
  %78 = vmatpush1.msra.mxu0 0.0
  %79 = vmatprep.subr.mxu0 0.0
  %80 = vmatpush1.msra.mxu0 0.0
  %81 = vmatprep.subr.mxu0 0.0
  %82 = vmatpush1.msra.mxu0 0.0
  %83 = vmatprep.subr.mxu0 0.0
  %84 = vmatpush1.msra.mxu0 0.0
  %85 = vmatprep.subr.mxu0 0.0
  %86 = vmatpush1.msra.mxu0 0.0
  %87 = vmatprep.subr.mxu0 0.0
  %88 = vmatpush1.msra.mxu0 0.0
  %89 = vmatprep.subr.mxu0 0.0
  %90 = vmatpush1.msra.mxu0 0.0
  %91 = vmatprep.subr.mxu0 0.0
  %92 = vmatpush1.msra.mxu0 0.0
  %93 = vmatprep.mubr.f32.mxu0 0.0
  %94 = vmatmul.mubr.f32.gmra.mrb[0].mxu0 %v27
  %v95 = vpop.f32.mrb[0].mxu0
  %v96 = vadd.f32 %v24, %v95
  %v97 = vpop.f32.mrb[0].mxu0
  %98 = vdwg.mxu0
  %v99 = vtanh.pop %v96
  %v100 = vld [vmem:[%s2 + $0x40] sm:$0xff]
  %v101 = vld [vmem:[%s2 + $0x48] sm:$0xff]
  %v102 = vld [vmem:[%s2 + $0x50] sm:$0xff]
  %v103 = vld [vmem:[%s2 + $0x58] sm:$0x1]
  %v104 = vlaneseq
  %v105 = vshrl.u32 %v104, 7
  %v106 = vsub.s32 0, %v105
  %v107 = vrot.slane %v103, %v106
  %vm108 = vcmask 195584
  %v110 = vsel %vm108, %v17, 0
  %112 = vmatprep.subr.mxu0 0.0
  %113 = vmatpush1.msra.mxu0 %v100
  %114 = vmatprep.subr.mxu0 0.0
  %115 = vmatpush1.msra.mxu0 %v101
  %116 = vmatprep.subr.mxu0 0.0
  %117 = vmatpush1.msra.mxu0 %v102
  %118 = vmatprep.subr.mxu0 0.0
  %119 = vmatpush1.msra.mxu0 0.0
  %120 = vmatprep.subr.mxu0 0.0
  %121 = vmatpush1.msra.mxu0 0.0
  %122 = vmatprep.subr.mxu0 0.0
  %123 = vmatpush1.msra.mxu0 0.0
  %124 = vmatprep.subr.mxu0 0.0
  %125 = vmatpush1.msra.mxu0 0.0
  %126 = vmatprep.subr.mxu0 0.0
  %127 = vmatpush1.msra.mxu0 0.0
  %128 = vmatprep.subr.mxu0 0.0
  %129 = vmatpush1.msra.mxu0 0.0
  %130 = vmatprep.subr.mxu0 0.0
  %131 = vmatpush1.msra.mxu0 0.0
  %132 = vmatprep.subr.mxu0 0.0
  %133 = vmatpush1.msra.mxu0 0.0
  %134 = vmatprep.subr.mxu0 0.0
  %135 = vmatpush1.msra.mxu0 0.0
  %136 = vmatprep.subr.mxu0 0.0
  %137 = vmatpush1.msra.mxu0 0.0
  %138 = vmatprep.subr.mxu0 0.0
  %139 = vmatpush1.msra.mxu0 0.0
  %140 = vmatprep.subr.mxu0 0.0
  %141 = vmatpush1.msra.mxu0 0.0
  %142 = vmatprep.subr.mxu0 0.0
  %143 = vmatpush1.msra.mxu0 0.0
  %144 = vmatprep.subr.mxu0 0.0
  %145 = vmatpush1.msra.mxu0 0.0
  %146 = vmatprep.subr.mxu0 0.0
  %147 = vmatpush1.msra.mxu0 0.0
  %148 = vmatprep.subr.mxu0 0.0
  %149 = vmatpush1.msra.mxu0 0.0
  %150 = vmatprep.subr.mxu0 0.0
  %151 = vmatpush1.msra.mxu0 0.0
  %152 = vmatprep.subr.mxu0 0.0
  %153 = vmatpush1.msra.mxu0 0.0
  %154 = vmatprep.subr.mxu0 0.0
  %155 = vmatpush1.msra.mxu0 0.0
  %156 = vmatprep.subr.mxu0 0.0
  %157 = vmatpush1.msra.mxu0 0.0
  %158 = vmatprep.subr.mxu0 0.0
  %159 = vmatpush1.msra.mxu0 0.0
  %160 = vmatprep.subr.mxu0 0.0
  %161 = vmatpush1.msra.mxu0 0.0
  %162 = vmatprep.subr.mxu0 0.0
  %163 = vmatpush1.msra.mxu0 0.0
  %164 = vmatprep.subr.mxu0 0.0
  %165 = vmatpush1.msra.mxu0 0.0
  %166 = vmatprep.subr.mxu0 0.0
  %167 = vmatpush1.msra.mxu0 0.0
  %168 = vmatprep.subr.mxu0 0.0
  %169 = vmatpush1.msra.mxu0 0.0
  %170 = vmatprep.subr.mxu0 0.0
  %171 = vmatpush1.msra.mxu0 0.0
  %172 = vmatprep.subr.mxu0 0.0
  %173 = vmatpush1.msra.mxu0 0.0
  %174 = vmatprep.subr.mxu0 0.0
  %175 = vmatpush1.msra.mxu0 0.0
  %176 = vmatprep.mubr.f32.mxu0 0.0
  %177 = vmatmul.mubr.f32.gmra.mrb[0].mxu0 %v110
  %v178 = vpop.f32.mrb[0].mxu0
  %v179 = vadd.f32 %v107, %v178
  %v180 = vpop.f32.mrb[0].mxu0
  %181 = vdwg.mxu0
  %v182 = vtanh.pop %v179
  %v183 = vld [vmem:[%s2 + $0x18] sm:$0xff]
  %v184 = vld [vmem:[%s2 + $0x20] sm:$0xff]
  %v185 = vld [vmem:[%s2 + $0x28] sm:$0xff]
  %v186 = vld [vmem:[%s2 + $0x30] sm:$0xff]
  %v187 = vld [vmem:[%s2 + $0x38] sm:$0x1]
  %v188 = vlaneseq
  %v189 = vshrl.u32 %v188, 7
  %v190 = vsub.s32 0, %v189
  %v191 = vrot.slane %v187, %v190
  %vm192 = vcmask 261120
  %v194 = vsel %vm192, %v99, 0
  %196 = vmatprep.subr.mxu0 0.0
  %197 = vmatpush1.msra.mxu0 %v183
  %198 = vmatprep.subr.mxu0 0.0
  %199 = vmatpush1.msra.mxu0 %v184
  %200 = vmatprep.subr.mxu0 0.0
  %201 = vmatpush1.msra.mxu0 %v185
  %202 = vmatprep.subr.mxu0 0.0
  %203 = vmatpush1.msra.mxu0 %v186
  %204 = vmatprep.subr.mxu0 0.0
  %205 = vmatpush1.msra.mxu0 0.0
  %206 = vmatprep.subr.mxu0 0.0
  %207 = vmatpush1.msra.mxu0 0.0
  %208 = vmatprep.subr.mxu0 0.0
  %209 = vmatpush1.msra.mxu0 0.0
  %210 = vmatprep.subr.mxu0 0.0
  %211 = vmatpush1.msra.mxu0 0.0
  %212 = vmatprep.subr.mxu0 0.0
  %213 = vmatpush1.msra.mxu0 0.0
  %214 = vmatprep.subr.mxu0 0.0
  %215 = vmatpush1.msra.mxu0 0.0
  %216 = vmatprep.subr.mxu0 0.0
  %217 = vmatpush1.msra.mxu0 0.0
  %218 = vmatprep.subr.mxu0 0.0
  %219 = vmatpush1.msra.mxu0 0.0
  %220 = vmatprep.subr.mxu0 0.0
  %221 = vmatpush1.msra.mxu0 0.0
  %222 = vmatprep.subr.mxu0 0.0
  %223 = vmatpush1.msra.mxu0 0.0
  %224 = vmatprep.subr.mxu0 0.0
  %225 = vmatpush1.msra.mxu0 0.0
  %226 = vmatprep.subr.mxu0 0.0
  %227 = vmatpush1.msra.mxu0 0.0
  %228 = vmatprep.subr.mxu0 0.0
  %229 = vmatpush1.msra.mxu0 0.0
  %230 = vmatprep.subr.mxu0 0.0
  %231 = vmatpush1.msra.mxu0 0.0
  %232 = vmatprep.subr.mxu0 0.0
  %233 = vmatpush1.msra.mxu0 0.0
  %234 = vmatprep.subr.mxu0 0.0
  %235 = vmatpush1.msra.mxu0 0.0
  %236 = vmatprep.subr.mxu0 0.0
  %237 = vmatpush1.msra.mxu0 0.0
  %238 = vmatprep.subr.mxu0 0.0
  %239 = vmatpush1.msra.mxu0 0.0
  %240 = vmatprep.subr.mxu0 0.0
  %241 = vmatpush1.msra.mxu0 0.0
  %242 = vmatprep.subr.mxu0 0.0
  %243 = vmatpush1.msra.mxu0 0.0
  %244 = vmatprep.subr.mxu0 0.0
  %245 = vmatpush1.msra.mxu0 0.0
  %246 = vmatprep.subr.mxu0 0.0
  %247 = vmatpush1.msra.mxu0 0.0
  %248 = vmatprep.subr.mxu0 0.0
  %249 = vmatpush1.msra.mxu0 0.0
  %250 = vmatprep.subr.mxu0 0.0
  %251 = vmatpush1.msra.mxu0 0.0
  %252 = vmatprep.subr.mxu0 0.0
  %253 = vmatpush1.msra.mxu0 0.0
  %254 = vmatprep.subr.mxu0 0.0
  %255 = vmatpush1.msra.mxu0 0.0
  %256 = vmatprep.subr.mxu0 0.0
  %257 = vmatpush1.msra.mxu0 0.0
  %258 = vmatprep.subr.mxu0 0.0
  %259 = vmatpush1.msra.mxu0 0.0
  %260 = vmatprep.mubr.f32.mxu0 0.0
  %261 = vmatmul.mubr.f32.gmra.mrb[0].mxu0 %v194
  %v262 = vpop.f32.mrb[0].mxu0
  %v263 = vadd.f32 %v191, %v262
  %v264 = vpop.f32.mrb[0].mxu0
  %265 = vdwg.mxu0
  %v266 = vtanh.pop %v263
  %v267 = vld [vmem:[%s2 + $0x60] sm:$0xff]
  %v268 = vld [vmem:[%s2 + $0x68] sm:$0xff]
  %v269 = vld [vmem:[%s2 + $0x70] sm:$0xff]
  %v270 = vld [vmem:[%s2 + $0x78] sm:$0xff]
  %v271 = vld [vmem:[%s2 + $0x80] sm:$0x1]
  %v272 = vlaneseq
  %v273 = vshrl.u32 %v272, 7
  %v274 = vsub.s32 0, %v273
  %v275 = vrot.slane %v271, %v274
  %v277 = vsel %vm192, %v182, 0
  %279 = vmatprep.subr.mxu0 0.0
  %280 = vmatpush1.msra.mxu0 %v267
  %281 = vmatprep.subr.mxu0 0.0
  %282 = vmatpush1.msra.mxu0 %v268
  %283 = vmatprep.subr.mxu0 0.0
  %284 = vmatpush1.msra.mxu0 %v269
  %285 = vmatprep.subr.mxu0 0.0
  %286 = vmatpush1.msra.mxu0 %v270
  %287 = vmatprep.subr.mxu0 0.0
  %288 = vmatpush1.msra.mxu0 0.0
  %289 = vmatprep.subr.mxu0 0.0
  %290 = vmatpush1.msra.mxu0 0.0
  %291 = vmatprep.subr.mxu0 0.0
  %292 = vmatpush1.msra.mxu0 0.0
  %293 = vmatprep.subr.mxu0 0.0
  %294 = vmatpush1.msra.mxu0 0.0
  %295 = vmatprep.subr.mxu0 0.0
  %296 = vmatpush1.msra.mxu0 0.0
  %297 = vmatprep.subr.mxu0 0.0
  %298 = vmatpush1.msra.mxu0 0.0
  %299 = vmatprep.subr.mxu0 0.0
  %300 = vmatpush1.msra.mxu0 0.0
  %301 = vmatprep.subr.mxu0 0.0
  %302 = vmatpush1.msra.mxu0 0.0
  %303 = vmatprep.subr.mxu0 0.0
  %304 = vmatpush1.msra.mxu0 0.0
  %305 = vmatprep.subr.mxu0 0.0
  %306 = vmatpush1.msra.mxu0 0.0
  %307 = vmatprep.subr.mxu0 0.0
  %308 = vmatpush1.msra.mxu0 0.0
  %309 = vmatprep.subr.mxu0 0.0
  %310 = vmatpush1.msra.mxu0 0.0
  %311 = vmatprep.subr.mxu0 0.0
  %312 = vmatpush1.msra.mxu0 0.0
  %313 = vmatprep.subr.mxu0 0.0
  %314 = vmatpush1.msra.mxu0 0.0
  %315 = vmatprep.subr.mxu0 0.0
  %316 = vmatpush1.msra.mxu0 0.0
  %317 = vmatprep.subr.mxu0 0.0
  %318 = vmatpush1.msra.mxu0 0.0
  %319 = vmatprep.subr.mxu0 0.0
  %320 = vmatpush1.msra.mxu0 0.0
  %321 = vmatprep.subr.mxu0 0.0
  %322 = vmatpush1.msra.mxu0 0.0
  %323 = vmatprep.subr.mxu0 0.0
  %324 = vmatpush1.msra.mxu0 0.0
  %325 = vmatprep.subr.mxu0 0.0
  %326 = vmatpush1.msra.mxu0 0.0
  %327 = vmatprep.subr.mxu0 0.0
  %328 = vmatpush1.msra.mxu0 0.0
  %329 = vmatprep.subr.mxu0 0.0
  %330 = vmatpush1.msra.mxu0 0.0
  %331 = vmatprep.subr.mxu0 0.0
  %332 = vmatpush1.msra.mxu0 0.0
  %333 = vmatprep.subr.mxu0 0.0
  %334 = vmatpush1.msra.mxu0 0.0
  %335 = vmatprep.subr.mxu0 0.0
  %336 = vmatpush1.msra.mxu0 0.0
  %337 = vmatprep.subr.mxu0 0.0
  %338 = vmatpush1.msra.mxu0 0.0
  %339 = vmatprep.subr.mxu0 0.0
  %340 = vmatpush1.msra.mxu0 0.0
  %341 = vmatprep.subr.mxu0 0.0
  %342 = vmatpush1.msra.mxu0 0.0
  %343 = vmatprep.mubr.f32.mxu0 0.0
  %344 = vmatmul.mubr.f32.gmra.mrb[0].mxu0 %v277
  %v345 = vpop.f32.mrb[0].mxu0
  %v346 = vadd.f32 %v275, %v345
  %v347 = vpop.f32.mrb[0].mxu0
  %348 = vdwg.mxu0
  %v349 = vtanh.pop %v346
  %v350 = vmul.f32 %v266, %v266
  %v351 = vmul.f32 %v349, %v349
  %v352 = vsel %vm25, %v350, 0.0
  %353 = vadd.xlane.f32.xlu0 %v352
  %v354 = vpop.xlane.xlu0 %353
  %v355 = vsel %vm25, %v351, 0.0
  %356 = vadd.xlane.f32.xlu0 %v355
  %v357 = vpop.xlane.xlu0 %356
  %v358 = vmax.f32 %v354, 1e-16
  %v359 = vmax.f32 %v357, 1e-16
  %v360 = vrsqrt.pop %v358
  %v361 = vrsqrt.pop %v359
  %v362 = vmul.f32 %v266, %v360
  %v363 = vmul.f32 %v349, %v361
  %v365 = vsel %vm25, %v362, 0
  %367 = vmatprep.subr.mxu0 0.0
  %368 = vmatpush1.xpose.msra.mxu0 %v365
  %369 = vmatprep.subr.mxu0 0.0
  %370 = vmatpush1.xpose.msra.mxu0 0.0
  %371 = vmatprep.subr.mxu0 0.0
  %372 = vmatpush1.xpose.msra.mxu0 0.0
  %373 = vmatprep.subr.mxu0 0.0
  %374 = vmatpush1.xpose.msra.mxu0 0.0
  %375 = vmatprep.subr.mxu0 0.0
  %376 = vmatpush1.xpose.msra.mxu0 0.0
  %377 = vmatprep.subr.mxu0 0.0
  %378 = vmatpush1.xpose.msra.mxu0 0.0
  %379 = vmatprep.subr.mxu0 0.0
  %380 = vmatpush1.xpose.msra.mxu0 0.0
  %381 = vmatprep.subr.mxu0 0.0
  %382 = vmatpush1.xpose.msra.mxu0 0.0
  %383 = vmatprep.subr.mxu0 0.0
  %384 = vmatpush1.xpose.msra.mxu0 0.0
  %385 = vmatprep.subr.mxu0 0.0
  %386 = vmatpush1.xpose.msra.mxu0 0.0
  %387 = vmatprep.subr.mxu0 0.0
  %388 = vmatpush1.xpose.msra.mxu0 0.0
  %389 = vmatprep.subr.mxu0 0.0
  %390 = vmatpush1.xpose.msra.mxu0 0.0
  %391 = vmatprep.subr.mxu0 0.0
  %392 = vmatpush1.xpose.msra.mxu0 0.0
  %393 = vmatprep.subr.mxu0 0.0
  %394 = vmatpush1.xpose.msra.mxu0 0.0
  %395 = vmatprep.subr.mxu0 0.0
  %396 = vmatpush1.xpose.msra.mxu0 0.0
  %397 = vmatprep.subr.mxu0 0.0
  %398 = vmatpush1.xpose.msra.mxu0 0.0
  %399 = vmatprep.subr.mxu0 0.0
  %400 = vmatpush1.xpose.msra.mxu0 0.0
  %401 = vmatprep.subr.mxu0 0.0
  %402 = vmatpush1.xpose.msra.mxu0 0.0
  %403 = vmatprep.subr.mxu0 0.0
  %404 = vmatpush1.xpose.msra.mxu0 0.0
  %405 = vmatprep.subr.mxu0 0.0
  %406 = vmatpush1.xpose.msra.mxu0 0.0
  %407 = vmatprep.subr.mxu0 0.0
  %408 = vmatpush1.xpose.msra.mxu0 0.0
  %409 = vmatprep.subr.mxu0 0.0
  %410 = vmatpush1.xpose.msra.mxu0 0.0
  %411 = vmatprep.subr.mxu0 0.0
  %412 = vmatpush1.xpose.msra.mxu0 0.0
  %413 = vmatprep.subr.mxu0 0.0
  %414 = vmatpush1.xpose.msra.mxu0 0.0
  %415 = vmatprep.subr.mxu0 0.0
  %416 = vmatpush1.xpose.msra.mxu0 0.0
  %417 = vmatprep.subr.mxu0 0.0
  %418 = vmatpush1.xpose.msra.mxu0 0.0
  %419 = vmatprep.subr.mxu0 0.0
  %420 = vmatpush1.xpose.msra.mxu0 0.0
  %421 = vmatprep.subr.mxu0 0.0
  %422 = vmatpush1.xpose.msra.mxu0 0.0
  %423 = vmatprep.subr.mxu0 0.0
  %424 = vmatpush1.xpose.msra.mxu0 0.0
  %425 = vmatprep.subr.mxu0 0.0
  %426 = vmatpush1.xpose.msra.mxu0 0.0
  %427 = vmatprep.subr.mxu0 0.0
  %428 = vmatpush1.xpose.msra.mxu0 0.0
  %429 = vmatprep.subr.mxu0 0.0
  %430 = vmatpush1.xpose.msra.mxu0 0.0
  %431 = vmatprep.mubr.f32.mxu0 0.0
  %432 = vmatmul.mubr.f32.gmra.mrb[0].mxu0 %v365
  %v433 = vpop.f32.mrb[0].mxu0
  %v434 = vadd.f32 0.0, %v433
  %v435 = vpop.f32.mrb[0].mxu0
  %436 = vdwg.mxu0
  %v438 = vsel %vm25, %v363, 0
  %440 = vmatprep.subr.mxu0 0.0
  %441 = vmatpush1.xpose.msra.mxu0 %v438
  %442 = vmatprep.subr.mxu0 0.0
  %443 = vmatpush1.xpose.msra.mxu0 0.0
  %444 = vmatprep.subr.mxu0 0.0
  %445 = vmatpush1.xpose.msra.mxu0 0.0
  %446 = vmatprep.subr.mxu0 0.0
  %447 = vmatpush1.xpose.msra.mxu0 0.0
  %448 = vmatprep.subr.mxu0 0.0
  %449 = vmatpush1.xpose.msra.mxu0 0.0
  %450 = vmatprep.subr.mxu0 0.0
  %451 = vmatpush1.xpose.msra.mxu0 0.0
  %452 = vmatprep.subr.mxu0 0.0
  %453 = vmatpush1.xpose.msra.mxu0 0.0
  %454 = vmatprep.subr.mxu0 0.0
  %455 = vmatpush1.xpose.msra.mxu0 0.0
  %456 = vmatprep.subr.mxu0 0.0
  %457 = vmatpush1.xpose.msra.mxu0 0.0
  %458 = vmatprep.subr.mxu0 0.0
  %459 = vmatpush1.xpose.msra.mxu0 0.0
  %460 = vmatprep.subr.mxu0 0.0
  %461 = vmatpush1.xpose.msra.mxu0 0.0
  %462 = vmatprep.subr.mxu0 0.0
  %463 = vmatpush1.xpose.msra.mxu0 0.0
  %464 = vmatprep.subr.mxu0 0.0
  %465 = vmatpush1.xpose.msra.mxu0 0.0
  %466 = vmatprep.subr.mxu0 0.0
  %467 = vmatpush1.xpose.msra.mxu0 0.0
  %468 = vmatprep.subr.mxu0 0.0
  %469 = vmatpush1.xpose.msra.mxu0 0.0
  %470 = vmatprep.subr.mxu0 0.0
  %471 = vmatpush1.xpose.msra.mxu0 0.0
  %472 = vmatprep.subr.mxu0 0.0
  %473 = vmatpush1.xpose.msra.mxu0 0.0
  %474 = vmatprep.subr.mxu0 0.0
  %475 = vmatpush1.xpose.msra.mxu0 0.0
  %476 = vmatprep.subr.mxu0 0.0
  %477 = vmatpush1.xpose.msra.mxu0 0.0
  %478 = vmatprep.subr.mxu0 0.0
  %479 = vmatpush1.xpose.msra.mxu0 0.0
  %480 = vmatprep.subr.mxu0 0.0
  %481 = vmatpush1.xpose.msra.mxu0 0.0
  %482 = vmatprep.subr.mxu0 0.0
  %483 = vmatpush1.xpose.msra.mxu0 0.0
  %484 = vmatprep.subr.mxu0 0.0
  %485 = vmatpush1.xpose.msra.mxu0 0.0
  %486 = vmatprep.subr.mxu0 0.0
  %487 = vmatpush1.xpose.msra.mxu0 0.0
  %488 = vmatprep.subr.mxu0 0.0
  %489 = vmatpush1.xpose.msra.mxu0 0.0
  %490 = vmatprep.subr.mxu0 0.0
  %491 = vmatpush1.xpose.msra.mxu0 0.0
  %492 = vmatprep.subr.mxu0 0.0
  %493 = vmatpush1.xpose.msra.mxu0 0.0
  %494 = vmatprep.subr.mxu0 0.0
  %495 = vmatpush1.xpose.msra.mxu0 0.0
  %496 = vmatprep.subr.mxu0 0.0
  %497 = vmatpush1.xpose.msra.mxu0 0.0
  %498 = vmatprep.subr.mxu0 0.0
  %499 = vmatpush1.xpose.msra.mxu0 0.0
  %500 = vmatprep.subr.mxu0 0.0
  %501 = vmatpush1.xpose.msra.mxu0 0.0
  %502 = vmatprep.subr.mxu0 0.0
  %503 = vmatpush1.xpose.msra.mxu0 0.0
  %504 = vmatprep.mubr.f32.mxu0 0.0
  %505 = vmatmul.mubr.f32.gmra.mrb[0].mxu0 %v438
  %v506 = vpop.f32.mrb[0].mxu0
  %v507 = vadd.f32 0.0, %v506
  %v508 = vpop.f32.mrb[0].mxu0
  %509 = vdwg.mxu0
  %v510 = vsub.f32 1.0, %v434
  %v511 = vsub.f32 1.0, %v507
  %v512 = vmul.f32 %v510, %v510
  %v513 = vmul.f32 %v511, %v511
  %v514 = vsub.f32 0.0, %v512
  %v515 = vsub.f32 0.0, %v513
  %v516 = vmul.f32 %v514, 1.442695
  %v517 = vpow.pop %v516
  %v518 = vmul.f32 %v515, 1.442695
  %v519 = vpow.pop %v518
  %v520 = vlaneseq
  %v521 = vshrl.u32 %v520, 7
  %v522 = vadd.s32 %v521, 8
  %v523 = vlaneseq
  %v524 = vand.u32 %v523, 127
  %vm525 = vcmp.lt.s32.totalorder %v521, 0
  %v526 = vsub.s32 0, %v521
  %v527 = vsel %vm525, %v526, %v521
  %v528 = vshrl.u32 %v527, 3
  %v529 = vand.u32 %v527, 7
  %v530 = vsub.s32 0, %v529
  %v531 = vsel %vm525, %v530, %v529
  %vm532 = vcmp.lt.s32.totalorder %v522, 0
  %v533 = vsub.s32 0, %v522
  %v534 = vsel %vm532, %v533, %v522
  %v535 = vshrl.u32 %v534, 3
  %v536 = vand.u32 %v534, 7
  %v537 = vsub.s32 0, %v536
  %v538 = vsel %vm532, %v537, %v536
  %vm539 = vcmp.ne.s32.totalorder %v531, 0
  %vm540 = vcmp.ne.s32.totalorder %v538, 0
  %vm541 = vcmp.lt.s32.totalorder %v531, 0
  %vm542 = vcmp.lt.s32.totalorder %v538, 0
  %vm543 = vmand %vm541, %vm539
  %vm544 = vmand %vm542, %vm540
  %v545 = vadd.s32 %v531, 8
  %v546 = vadd.s32 %v538, 8
  %v547 = vsel %vm543, %v545, %v531
  %v548 = vsel %vm544, %v546, %v538
  %vm549 = vcmp.eq.s32.totalorder %v547, %v524
  %vm550 = vcmp.eq.s32.totalorder %v548, %v524
  %v551 = vsel %vm549, 0.0, %v517
  %v552 = vsel %vm550, 0.0, %v519
  %vm553 = vcmask 64512
  %v554 = vsel %vm553, %v551, 0.0
  %555 = vadd.xlane.f32.xlu0 %v554
  %v556 = vpop.xlane.xlu0 %555
  %v557 = vsel %vm553, %v552, 0.0
  %558 = vadd.xlane.f32.xlu0 %v557
  %v559 = vpop.xlane.xlu0 %558
  %v560 = vrcp.pop %v556
  %v561 = vrcp.pop %v559
  %v562 = vmul.f32 %v556, %v560
  %v563 = vmul.f32 %v559, %v561
  %v564 = vsub.f32 2.0, %v562
  %v565 = vsub.f32 2.0, %v563
  %v566 = vmul.f32 %v560, %v564
  %v567 = vmul.f32 %v561, %v565
  %v568 = vmul.f32 %v551, %v566
  %v569 = vmul.f32 %v552, %v567
  %v570 = vmax.f32 %v568, 1e-08
  %v571 = vmax.f32 %v569, 1e-08
  %v572 = vlog2.pop %v570
  %v573 = vmul.f32 %v572, 0.6931472
  %v574 = vlog2.pop %v571
  %v575 = vmul.f32 %v574, 0.6931472
  %576 = vst.msk [vmem:[%s3] sm:$0xff] %vm553, %v573
  %577 = vst.msk [vmem:[%s3 + $0x8] sm:$0xff] %vm553, %v575
  %578 = vst.msk [vmem:[%s4] sm:$0xff] %vm25, %v362
  %579 = vst.msk [vmem:[%s4 + $0x8] sm:$0xff] %vm25, %v363
  // Predicated region
  $region14: #{net_forward.1} parent=0 // pred_check
    _
  $region15: #{net_forward.1} parent=0 // pred_check_branch
    %581 = sbr.rel (0) target = $region17
  $region16: #{net_forward.1} parent=0 // pred_region
    _
  $region17: #{net_forward.1} parent=0 // pred_fallthru
    _
  // Predicated region
  $region18: #{net_forward.1} parent=0 // pred_check
    _
  $region19: #{net_forward.1} parent=0 // pred_check_branch
    %583 = sbr.rel (0) target = $region21
  $region20: #{net_forward.1} parent=0 // pred_region
    _
  $region21: #{net_forward.1} parent=0 // pred_fallthru
    _
  // Predicated region
  $region22: #{net_forward.1} parent=0 // pred_check
    _
  $region23: #{net_forward.1} parent=0 // pred_check_branch
    %585 = sbr.rel (0) target = $region25
  $region24: #{net_forward.1} parent=0 // pred_region
    _
  $region25: #{net_forward.1} parent=0 // pred_fallthru
    _
  // Predicated region
  $region26: #{net_forward.1} parent=0 // pred_check
    _
  $region27: #{net_forward.1} parent=0 // pred_check_branch
    %587 = sbr.rel (0) target = $region29
  $region28: #{net_forward.1} parent=0 // pred_region
    _
  $region29: #{net_forward.1} parent=0 // pred_fallthru
    _

</llo_original>
